<compile_context>
chip_gen: v5e
topology: v5e:2x2
jax: 0.10.0
libtpu: 0.0.40
codegen_flags: <defaults>
</compile_context>

<pallas_src>
import jax
import jax.numpy as jnp
import numpy as np
from jax import lax
from jax.experimental import pallas as pl
from jax.experimental.pallas import tpu as pltpu

NUM_CAPSULES = 4
IN_CHANNELS = 32
OUT_CHANNELS = 32
KERNEL_SIZE = 3
NUM_ROUTES = 32 * 4 * 4  # 512


def _primary_caps_kernel(p_ref, w_ref, b_ref, o_ref):
    # p_ref: (WP, bt*HP, K)    bf16 im2col patches, rows ordered (b, hp) within each wp slab
    # w_ref: (K, Ctot)         bf16 im2col weight matrix (Ctot = num_caps * out_ch = 128)
    # b_ref: (1, Ctot)         f32 bias
    # o_ref: (WP, bt*HP, Ctot) squashed output (lane-dense: last dim = 128)
    wp, rows, k = p_ref.shape
    ctot = w_ref.shape[1]

    # Single MXU matmul: (wp*rows, K) x (K, Ctot), bf16 inputs / f32 accumulation.
    patches = p_ref[...].reshape(wp * rows, k)            # merge leading dims: free view
    acc = jnp.dot(patches, w_ref[...], preferred_element_type=jnp.float32)
    acc = acc + b_ref[...]                                # (wp*rows, Ctot) f32
    acc = acc.reshape(wp, rows, ctot)                     # split leading dim: free view

    # Squash: after torch's stack(dim=1).view(B, 512, -1) the capsule dim D is the
    # conv Wp axis, which is the LEADING axis here -> pure VPU slab-sum, no relayout.
    sq = jnp.sum(acc * acc, axis=0)                       # (rows, Ctot)
    # scale = |v| / (1 + |v|^2); zero vectors give 0 (reference formula would be 0/0).
    scale = jnp.sqrt(sq) * pl.reciprocal(1.0 + sq, approx=False)
    o_ref[...] = (acc * scale[None, :, :]).astype(o_ref.dtype)


def _pick_batch_tile(batch):
    """Images per grid step.

    bt*HP (sublane extent of a block) must be a multiple of 8 unless the block spans
    the whole padded batch, so bt is kept even. Capped at 64 (M = wp*bt*hp = 1024
    rows fills the MXU, ~3.5 MB/step of VMEM) and sized to give >=2 grid steps when
    possible so the "parallel" axis shards across v7x's two TensorCores.
    """
    if batch <= 2:
        return batch
    bt = min(64, (batch + 1) // 2)
    if bt % 2:
        bt += 1
    return min(bt, 64)


def primary_caps_forward(x_nchw, w_all, b_all, num_routes=NUM_ROUTES):
    """x_nchw: (B, Cin, H, W); w_all: (Ctot, Cin, KH, KW) capsule-major; b_all: (Ctot,)."""
    B, cin, H, W = x_nchw.shape
    ctot, _, KH, KW = w_all.shape
    hp, wp = H - KH + 1, W - KW + 1
    K = KH * KW * cin

    # ---- one-time layout glue in the wrapper (tiny tensors, plain XLA ops) ----
    x_nhwc = jnp.transpose(x_nchw, (0, 2, 3, 1))                       # (B, H, W, Cin)
    # im2col patches, K ordered (kh, kw, cin) to match w_mat below.
    cols = [x_nhwc[:, kh:kh + hp, kw:kw + wp, :]
            for kh in range(KH) for kw in range(KW)]
    patches = jnp.concatenate(cols, axis=-1)                           # (B, hp, wp, K)
    # wp-major row order so the in-kernel squash reduction is a leading-axis slab sum.
    patches = jnp.transpose(patches, (2, 0, 1, 3))                     # (wp, B, hp, K)

    bt = _pick_batch_tile(B)
    pad = (-B) % bt
    if pad:
        patches = jnp.pad(patches, ((0, 0), (0, pad), (0, 0), (0, 0)))
    bp = B + pad
    patches = patches.reshape(wp, bp * hp, K).astype(jnp.bfloat16)     # MXU-native input

    w_mat = jnp.transpose(w_all, (2, 3, 1, 0)).reshape(K, ctot).astype(jnp.bfloat16)
    b2 = b_all.reshape(1, ctot).astype(jnp.float32)

    rows = bt * hp
    out = pl.pallas_call(
        _primary_caps_kernel,
        out_shape=jax.ShapeDtypeStruct((wp, bp * hp, ctot), x_nchw.dtype),
        grid=(bp // bt,),
        in_specs=[
            pl.BlockSpec((wp, rows, K), lambda i: (0, i, 0)),
            # Grid-invariant blocks: constant block index -> no per-step re-DMA.
            pl.BlockSpec((K, ctot), lambda i: (0, 0)),
            pl.BlockSpec((1, ctot), lambda i: (0, 0)),
        ],
        out_specs=pl.BlockSpec((wp, rows, ctot), lambda i: (0, i, 0)),
        compiler_params=pltpu.CompilerParams(dimension_semantics=("parallel",)),
    )(patches, w_mat, b2)

    if pad:
        out = out[:, :B * hp, :]
    # (wp, B*hp, Ctot) -> (B, Ctot, hp, wp) -> (B, num_routes, D): tiny permute + free view.
    out = out.reshape(wp, B, hp, ctot)
    out = jnp.transpose(out, (1, 3, 2, 0))
    return out.reshape(B, num_routes, -1)


def primary_caps_reference(x_nchw, w_all, b_all, num_routes=NUM_ROUTES):
    """Pure-JAX (f32) reference of the PyTorch forward."""
    conv = lax.conv_general_dilated(
        x_nchw, w_all, window_strides=(1, 1), padding="VALID",
        dimension_numbers=("NCHW", "OIHW", "NCHW"))
    conv = conv + b_all[None, :, None, None]
    u = conv.reshape(x_nchw.shape[0], num_routes, -1)
    sq = jnp.sum(u * u, axis=-1, keepdims=True)
    return sq * u / ((1.0 + sq) * jnp.sqrt(sq))


if __name__ == "__main__":
    key = jax.random.PRNGKey(0)
    kx, kw, kb = jax.random.split(key, 3)

    # 6x6 spatial -> 4x4 after valid 3x3 conv: 4 caps * 32 ch * 16 = 2048 = 512 routes * 4.
    B, H, W = 2, 6, 6
    x = jax.random.normal(kx, (B, IN_CHANNELS, H, W), jnp.float32)

    # Deterministic params mirroring __init__: xavier_normal_ weights, PyTorch-default bias.
    fan_in = IN_CHANNELS * KERNEL_SIZE * KERNEL_SIZE
    fan_out = OUT_CHANNELS * KERNEL_SIZE * KERNEL_SIZE
    std = float(np.sqrt(2.0 / (fan_in + fan_out)))
    w_all = std * jax.random.normal(
        kw, (NUM_CAPSULES * OUT_CHANNELS, IN_CHANNELS, KERNEL_SIZE, KERNEL_SIZE),
        jnp.float32)
    bound = 1.0 / float(np.sqrt(fan_in))
    b_all = jax.random.uniform(kb, (NUM_CAPSULES * OUT_CHANNELS,), jnp.float32,
                               minval=-bound, maxval=bound)

    out = jax.block_until_ready(primary_caps_forward(x, w_all, b_all))
    ref = jax.block_until_ready(primary_caps_reference(x, w_all, b_all))

    D = (NUM_CAPSULES * OUT_CHANNELS * (H - 2) * (W - 2)) // NUM_ROUTES
    assert out.shape == (B, NUM_ROUTES, D), out.shape
    if not np.allclose(np.asarray(out), np.asarray(ref), atol=2e-2, rtol=2e-2):
        raise AssertionError("Pallas output mismatch vs JAX reference")
    print("KERNEL_OK")
</pallas_src>

<mosaic_0001>
module attributes {stable_mosaic.version = 11 : i64} {
  func.func @_primary_caps_kernel(%arg0: i32, %arg1: memref<4x8x288xbf16, #tpu.memory_space<vmem>>, %arg2: memref<288x128xbf16, #tpu.memory_space<vmem>>, %arg3: memref<1x128xf32, #tpu.memory_space<vmem>>, %arg4: memref<4x8x128xf32, #tpu.memory_space<vmem>>) attributes {dimension_semantics = [#tpu.dimension_semantics<parallel>], iteration_bounds = array<i64: 1>, scalar_prefetch = 0 : i64, scratch_operands = 0 : i64, tpu.core_type = #tpu.core_type<tc>, window_params = [{transform_indices = @transform_0, window_bounds = array<i64: 4, 8, 288>}, {pipeline_mode = #tpu.pipeline_mode<synchronous>, transform_indices = @transform_1, window_bounds = array<i64: 288, 128>}, {pipeline_mode = #tpu.pipeline_mode<synchronous>, transform_indices = @transform_2, window_bounds = array<i64: 1, 128>}, {transform_indices = @transform_3, window_bounds = array<i64: 4, 8, 128>}]} {
    %c0 = arith.constant 0 : index
    %c0_0 = arith.constant 0 : index
    %c0_1 = arith.constant 0 : index
    %0 = vector.load %arg1[%c0, %c0_0, %c0_1] : memref<4x8x288xbf16, #tpu.memory_space<vmem>>, vector<4x8x288xbf16>
    %1 = vector.shape_cast %0 : vector<4x8x288xbf16> to vector<32x288xbf16>
    %c0_2 = arith.constant 0 : index
    %c0_3 = arith.constant 0 : index
    %2 = vector.load %arg2[%c0_2, %c0_3] : memref<288x128xbf16, #tpu.memory_space<vmem>>, vector<288x128xbf16>
    %cst = arith.constant dense<0.000000e+00> : vector<32x128xf32>
    %3 = tpu.matmul %1, %2, %cst {dimension_numbers = #tpu.dot_dimension_numbers<[1], [0], [0], [1], [0, 0, 1, 1], [], []>} : vector<32x288xbf16>, vector<288x128xbf16>, vector<32x128xf32> -> vector<32x128xf32>
    %c0_4 = arith.constant 0 : index
    %c0_5 = arith.constant 0 : index
    %4 = vector.load %arg3[%c0_4, %c0_5] : memref<1x128xf32, #tpu.memory_space<vmem>>, vector<1x128xf32>
    %5 = vector.broadcast %4 : vector<1x128xf32> to vector<32x128xf32>
    %6 = arith.addf %3, %5 : vector<32x128xf32>
    %7 = vector.shape_cast %6 : vector<32x128xf32> to vector<4x8x128xf32>
    %8 = arith.mulf %7, %7 : vector<4x8x128xf32>
    %cst_6 = arith.constant dense<0.000000e+00> : vector<8x128xf32>
    %9 = vector.multi_reduction <add>, %8, %cst_6 [0] : vector<4x8x128xf32> to vector<8x128xf32>
    %10 = math.sqrt %9 : vector<8x128xf32>
    %cst_7 = arith.constant 1.000000e+00 : f32
    %11 = vector.broadcast %cst_7 : f32 to vector<8x128xf32>
    %12 = arith.addf %11, %9 : vector<8x128xf32>
    %13 = tpu.reciprocal %12 : vector<8x128xf32> -> vector<8x128xf32>
    %14 = arith.mulf %10, %13 : vector<8x128xf32>
    %15 = vector.shape_cast %14 : vector<8x128xf32> to vector<1x8x128xf32>
    %16 = vector.broadcast %15 : vector<1x8x128xf32> to vector<4x8x128xf32>
    %17 = arith.mulf %7, %16 : vector<4x8x128xf32>
    %c0_8 = arith.constant 0 : index
    %c0_9 = arith.constant 0 : index
    %c0_10 = arith.constant 0 : index
    %18 = vector.load %arg4[%c0_8, %c0_9, %c0_10] : memref<4x8x128xf32, #tpu.memory_space<vmem>>, vector<4x8x128xf32>
    tpu.vector_store %arg4[%c0_8, %c0_9, %c0_10], %17 {strides = array<i32>} : memref<4x8x128xf32, #tpu.memory_space<vmem>>, vector<4x8x128xf32>,
    return
  }
  func.func @transform_0(%arg0: i32) -> (i32, i32, i32) {
    %c0_i32 = arith.constant 0 : i32
    %c0_i32_0 = arith.constant 0 : i32
    %c0_i32_1 = arith.constant 0 : i32
    return %c0_i32, %arg0, %c0_i32_0 : i32, i32, i32
  }
  func.func @transform_1(%arg0: i32) -> (i32, i32) {
    %c0_i32 = arith.constant 0 : i32
    %c0_i32_0 = arith.constant 0 : i32
    %c0_i32_1 = arith.constant 0 : i32
    return %c0_i32, %c0_i32_0 : i32, i32
  }
  func.func @transform_2(%arg0: i32) -> (i32, i32) {
    %c0_i32 = arith.constant 0 : i32
    %c0_i32_0 = arith.constant 0 : i32
    %c0_i32_1 = arith.constant 0 : i32
    return %c0_i32, %c0_i32_0 : i32, i32
  }
  func.func @transform_3(%arg0: i32) -> (i32, i32, i32) {
    %c0_i32 = arith.constant 0 : i32
    %c0_i32_0 = arith.constant 0 : i32
    %c0_i32_1 = arith.constant 0 : i32
    return %c0_i32, %arg0, %c0_i32_0 : i32, i32, i32
  }
}

</mosaic_0001>

<llo_original>
// kernel: tpu_custom_call.1
$region0: #{tpu_custom_call.1}
  #allocation0 [shape = 'u32[]', space=smem, size = 0x4, offset = 0x4, fixed_abs, tag = 'smem constant byte address 0x4 - core index']
  #allocation1 [shape = 'u32[72,128]{1,0:T(1,128)}', space=vmem, size = 0x9000, scoped, tag = 'internal scratch']
  %s0 = inlined_call_operand.hbm [shape: bf16[4,8,288], index: 0, kind: input, shape index: {}]
  %s1 = inlined_call_operand.hbm [shape: bf16[288,128], index: 1, kind: input, shape index: {}]
  %s2 = inlined_call_operand.vmem [shape: f32[1,128], index: 2, kind: input, shape index: {}]
  %s3 = inlined_call_operand.hbm [shape: f32[4,8,128], index: 3, kind: output, shape index: {}]
  %s4 = sld [smem:[#allocation0]]
  $region30: #{tpu_custom_call.1} parent=0
    _
  %s6 = ssub.s32 1, %s4
  %s7 = scalar_select 0, %s6, %s4
  $region1: #{tpu_custom_call.1} parent=0
    #allocation2 [shape = 'u8[24576]{0}', space=vmem, size = 0x6000, scoped, tag = 'input window, operand 0, single buffered']
    #allocation3 [shape = 's32[1]{0}', space=sflag, size = 0x4, scoped, tag = 'scoped memory for tpu_custom_call.1']
    #allocation4 [shape = 's32[1]{0}', space=sflag, size = 0x4, scoped, tag = 'scoped memory for tpu_custom_call.1']
    #allocation5 [shape = 'u8[73728]{0}', space=vmem, size = 0x12000, scoped, tag = 'input window, operand 1, single buffered']
    #allocation6 [shape = 's32[1]{0}', space=sflag, size = 0x4, scoped, tag = 'scoped memory for tpu_custom_call.1']
    #allocation7 [shape = 'u8[16384]{0}', space=vmem, size = 0x4000, scoped, tag = 'output window, operand 0, single buffered']
    %8 = vsyncpa [#allocation3], 0
    %9 = vsyncpa [#allocation6], 0
    %10 = vsyncpa [#allocation4], 0
    // Predicated region
    $region2: #{tpu_custom_call.1} parent=1 // pred_check
      _
    $region3: #{tpu_custom_call.1} parent=1 // pred_check_branch
      %12 = sbr.rel (0) target = $region5
    $region4: #{tpu_custom_call.1} parent=1 // pred_region
      %14 = vsyncadd [#allocation3], 0
      %s15 = sshll.u32 %s0, 4
      %s16 = int_to_ptr.hbm [resolvable:$true] %s15
      %s17 = sshll.u32 [#allocation2], 4
      %s18 = int_to_ptr.vmem [resolvable:$true] %s17
      %23 = dma.hbm_to_vmem [thread:$0]  %s16, 768, %s18, [#allocation3], 192, 192, 12
    $region5: #{tpu_custom_call.1} parent=1 // pred_fallthru
      _
    // Predicated region
    $region6: #{tpu_custom_call.1} parent=1 // pred_check
      _
    $region7: #{tpu_custom_call.1} parent=1 // pred_check_branch
      %25 = sbr.rel (0) target = $region9
    $region8: #{tpu_custom_call.1} parent=1 // pred_region
      %27 = vsyncadd [#allocation6], 0
      %s28 = sshll.u32 %s1, 4
      %s29 = int_to_ptr.hbm [resolvable:$true] %s28
      %s30 = sshll.u32 [#allocation5], 4
      %s31 = int_to_ptr.vmem [resolvable:$true] %s30
      %36 = dma.hbm_to_vmem [thread:$0]  %s29, 2304, %s31, [#allocation6], 64, 64, 4
    $region9: #{tpu_custom_call.1} parent=1 // pred_fallthru
      _
    // Predicated region
    $region10: #{tpu_custom_call.1} parent=1 // pred_check
      _
    $region11: #{tpu_custom_call.1} parent=1 // pred_check_branch
      %38 = sbr.rel (0) target = $region13
    $region12: #{tpu_custom_call.1} parent=1 // pred_region
      _
    $region13: #{tpu_custom_call.1} parent=1 // pred_fallthru
      _
    // Predicated region
    $region14: #{tpu_custom_call.1} parent=1 // pred_check
      _
    $region15: #{tpu_custom_call.1} parent=1 // pred_check_branch
      %40 = sbr.rel (0) target = $region17
    $region16: #{tpu_custom_call.1} parent=1 // pred_region
      %42 = dma.done [#allocation3], 768
    $region17: #{tpu_custom_call.1} parent=1 // pred_fallthru
      _
    // Predicated region
    $region18: #{tpu_custom_call.1} parent=1 // pred_check
      _
    $region19: #{tpu_custom_call.1} parent=1 // pred_check_branch
      %44 = sbr.rel (0) target = $region21
    $region20: #{tpu_custom_call.1} parent=1 // pred_region
      %46 = dma.done [#allocation6], 2304
    $region21: #{tpu_custom_call.1} parent=1 // pred_fallthru
      _
    %v48 = vld [vmem:[#allocation2] sm:$0xff]
    %v49 = vld [vmem:[#allocation2 + $0x8] sm:$0xf]
    %v50 = vld [vmem:[#allocation2 + $0xc] sm:$0xff]
    %v51 = vld [vmem:[#allocation2 + $0x14] sm:$0xf]
    %v52 = vld [vmem:[#allocation2 + $0x18] sm:$0xff]
    %v53 = vld [vmem:[#allocation2 + $0x20] sm:$0xf]
    %v54 = vld [vmem:[#allocation2 + $0x24] sm:$0xff]
    %v55 = vld [vmem:[#allocation2 + $0x2c] sm:$0xf]
    %v56 = vld [vmem:[#allocation5] sm:$0xf]
    %v57 = vld [vmem:[#allocation5 + $0x4] sm:$0xf]
    %v58 = vld [vmem:[#allocation5 + $0x8] sm:$0xf]
    %v59 = vld [vmem:[#allocation5 + $0xc] sm:$0xf]
    %v60 = vld [vmem:[#allocation5 + $0x10] sm:$0xf]
    %v61 = vld [vmem:[#allocation5 + $0x14] sm:$0xf]
    %v62 = vld [vmem:[#allocation5 + $0x18] sm:$0xf]
    %v63 = vld [vmem:[#allocation5 + $0x1c] sm:$0xf]
    %v64 = vld [vmem:[#allocation5 + $0x20] sm:$0xf]
    %v65 = vld [vmem:[#allocation5 + $0x24] sm:$0xf]
    %v66 = vld [vmem:[#allocation5 + $0x28] sm:$0xf]
    %v67 = vld [vmem:[#allocation5 + $0x2c] sm:$0xf]
    %v68 = vld [vmem:[#allocation5 + $0x30] sm:$0xf]
    %v69 = vld [vmem:[#allocation5 + $0x34] sm:$0xf]
    %v70 = vld [vmem:[#allocation5 + $0x38] sm:$0xf]
    %v71 = vld [vmem:[#allocation5 + $0x3c] sm:$0xf]
    %v72 = vld [vmem:[#allocation5 + $0x40] sm:$0xf]
    %v73 = vld [vmem:[#allocation5 + $0x44] sm:$0xf]
    %v74 = vld [vmem:[#allocation5 + $0x48] sm:$0xf]
    %v75 = vld [vmem:[#allocation5 + $0x4c] sm:$0xf]
    %v76 = vld [vmem:[#allocation5 + $0x50] sm:$0xf]
    %v77 = vld [vmem:[#allocation5 + $0x54] sm:$0xf]
    %v78 = vld [vmem:[#allocation5 + $0x58] sm:$0xf]
    %v79 = vld [vmem:[#allocation5 + $0x5c] sm:$0xf]
    %v80 = vld [vmem:[#allocation5 + $0x60] sm:$0xf]
    %v81 = vld [vmem:[#allocation5 + $0x64] sm:$0xf]
    %v82 = vld [vmem:[#allocation5 + $0x68] sm:$0xf]
    %v83 = vld [vmem:[#allocation5 + $0x6c] sm:$0xf]
    %v84 = vld [vmem:[#allocation5 + $0x70] sm:$0xf]
    %v85 = vld [vmem:[#allocation5 + $0x74] sm:$0xf]
    %v86 = vld [vmem:[#allocation5 + $0x78] sm:$0xf]
    %v87 = vld [vmem:[#allocation5 + $0x7c] sm:$0xf]
    %v88 = vld [vmem:[#allocation5 + $0x80] sm:$0xf]
    %v89 = vld [vmem:[#allocation5 + $0x84] sm:$0xf]
    %v90 = vld [vmem:[#allocation5 + $0x88] sm:$0xf]
    %v91 = vld [vmem:[#allocation5 + $0x8c] sm:$0xf]
    %v92 = vld [vmem:[%s2] sm:$0x1]
    %v94 = vperm.slane %v92, 0
    %v104 = vunpack.c.l.b16 %v48
    %v105 = vunpack.c.h.b16 %v48
    %v106 = vunpack.c.l.b16 %v49
    %v107 = vunpack.c.l.b16 %v50
    %v108 = vunpack.c.h.b16 %v50
    %v109 = vunpack.c.l.b16 %v51
    %v110 = vunpack.c.l.b16 %v52
    %v111 = vunpack.c.h.b16 %v52
    %v112 = vunpack.c.l.b16 %v53
    %v113 = vunpack.c.l.b16 %v54
    %v114 = vunpack.c.h.b16 %v54
    %v115 = vunpack.c.l.b16 %v55
    %v116 = vpack.c.b16 %v107, %v104
    %v117 = vpack.c.b16 %v108, %v105
    %v118 = vpack.c.b16 %v109, %v106
    %v119 = vpack.c.b16 %v113, %v110
    %v120 = vpack.c.b16 %v114, %v111
    %v121 = vpack.c.b16 %v115, %v112
    %v162 = vunpack.c.l.b16 %v56
    %v163 = vunpack.c.l.b16 %v57
    %v164 = vunpack.c.l.b16 %v58
    %v165 = vunpack.c.l.b16 %v59
    %v166 = vunpack.c.l.b16 %v60
    %v167 = vunpack.c.l.b16 %v61
    %v168 = vunpack.c.l.b16 %v62
    %v169 = vunpack.c.l.b16 %v63
    %v170 = vunpack.c.l.b16 %v64
    %v171 = vunpack.c.l.b16 %v65
    %v172 = vunpack.c.l.b16 %v66
    %v173 = vunpack.c.l.b16 %v67
    %v174 = vunpack.c.l.b16 %v68
    %v175 = vunpack.c.l.b16 %v69
    %v176 = vunpack.c.l.b16 %v70
    %v177 = vunpack.c.l.b16 %v71
    %v178 = vunpack.c.l.b16 %v72
    %v179 = vunpack.c.l.b16 %v73
    %v180 = vunpack.c.l.b16 %v74
    %v181 = vunpack.c.l.b16 %v75
    %v182 = vunpack.c.l.b16 %v76
    %v183 = vunpack.c.l.b16 %v77
    %v184 = vunpack.c.l.b16 %v78
    %v185 = vunpack.c.l.b16 %v79
    %v186 = vunpack.c.l.b16 %v80
    %v187 = vunpack.c.l.b16 %v81
    %v188 = vunpack.c.l.b16 %v82
    %v189 = vunpack.c.l.b16 %v83
    %v190 = vunpack.c.l.b16 %v84
    %v191 = vunpack.c.l.b16 %v85
    %v192 = vunpack.c.l.b16 %v86
    %v193 = vunpack.c.l.b16 %v87
    %v194 = vunpack.c.l.b16 %v88
    %v195 = vunpack.c.l.b16 %v89
    %v196 = vunpack.c.l.b16 %v90
    %v197 = vunpack.c.l.b16 %v91
    %v198 = vpack.c.b16 %v163, %v162
    %v199 = vpack.c.b16 %v165, %v164
    %v200 = vpack.c.b16 %v167, %v166
    %v201 = vpack.c.b16 %v169, %v168
    %v202 = vpack.c.b16 %v171, %v170
    %v203 = vpack.c.b16 %v173, %v172
    %v204 = vpack.c.b16 %v175, %v174
    %v205 = vpack.c.b16 %v177, %v176
    %v206 = vpack.c.b16 %v179, %v178
    %v207 = vpack.c.b16 %v181, %v180
    %v208 = vpack.c.b16 %v183, %v182
    %v209 = vpack.c.b16 %v185, %v184
    %v210 = vpack.c.b16 %v187, %v186
    %v211 = vpack.c.b16 %v189, %v188
    %v212 = vpack.c.b16 %v191, %v190
    %v213 = vpack.c.b16 %v193, %v192
    %v214 = vpack.c.b16 %v195, %v194
    %v215 = vpack.c.b16 %v197, %v196
    %vm234 = vcmask 261120
    %v236 = vsel %vm234, %v118, 0
    %v239 = vsel %vm234, %v121, 0
    %241 = vmatpush.bf16.msra.mxu0 %v205
    %242 = vmatpush.bf16.msra.mxu0 %v204
    %243 = vmatpush.bf16.msra.mxu0 %v203
    %244 = vmatpush.bf16.msra.mxu0 %v202
    %245 = vmatpush.bf16.msra.mxu0 %v201
    %246 = vmatpush.bf16.msra.mxu0 %v200
    %247 = vmatpush.bf16.msra.mxu0 %v199
    %248 = vmatpush.bf16.msra.mxu0 %v198
    %249 = vmatmul.bf16.gmra.mxu0 %v116
    %v250 = vpop.f32.mrf.mxu0
    %v251 = vadd.f32 %v94, %v250
    %v252 = vpop.f32.mrf.mxu0
    %v253 = vadd.f32 %v94, %v252
    %254 = vmatmul.bf16.gmra.mxu0 %v119
    %v255 = vpop.f32.mrf.mxu0
    %v256 = vadd.f32 %v94, %v255
    %v257 = vpop.f32.mrf.mxu0
    %v258 = vadd.f32 %v94, %v257
    %259 = vdwg.mxu0
    %260 = vmatpush.bf16.msra.mxu0 %v213
    %261 = vmatpush.bf16.msra.mxu0 %v212
    %262 = vmatpush.bf16.msra.mxu0 %v211
    %263 = vmatpush.bf16.msra.mxu0 %v210
    %264 = vmatpush.bf16.msra.mxu0 %v209
    %265 = vmatpush.bf16.msra.mxu0 %v208
    %266 = vmatpush.bf16.msra.mxu0 %v207
    %267 = vmatpush.bf16.msra.mxu0 %v206
    %268 = vmatmul.bf16.gmra.mxu0 %v117
    %v269 = vpop.f32.mrf.mxu0
    %v270 = vadd.f32 %v251, %v269
    %v271 = vpop.f32.mrf.mxu0
    %v272 = vadd.f32 %v253, %v271
    %273 = vmatmul.bf16.gmra.mxu0 %v120
    %v274 = vpop.f32.mrf.mxu0
    %v275 = vadd.f32 %v256, %v274
    %v276 = vpop.f32.mrf.mxu0
    %v277 = vadd.f32 %v258, %v276
    %278 = vdwg.mxu0
    %279 = vmatpush.bf16.msra.mxu0 0
    %280 = vmatpush.bf16.msra.mxu0 0
    %281 = vmatpush.bf16.msra.mxu0 0
    %282 = vmatpush.bf16.msra.mxu0 0
    %283 = vmatpush.bf16.msra.mxu0 0
    %284 = vmatpush.bf16.msra.mxu0 0
    %285 = vmatpush.bf16.msra.mxu0 %v215
    %286 = vmatpush.bf16.msra.mxu0 %v214
    %287 = vmatmul.bf16.gmra.mxu0 %v236
    %v288 = vpop.f32.mrf.mxu0
    %v289 = vadd.f32 %v270, %v288
    %v290 = vpop.f32.mrf.mxu0
    %v291 = vadd.f32 %v272, %v290
    %292 = vmatmul.bf16.gmra.mxu0 %v239
    %v293 = vpop.f32.mrf.mxu0
    %v294 = vadd.f32 %v275, %v293
    %v295 = vpop.f32.mrf.mxu0
    %v296 = vadd.f32 %v277, %v295
    %297 = vdwg.mxu0
    %v298 = vmul.f32 %v289, %v289
    %v299 = vmul.f32 %v291, %v291
    %v300 = vmul.f32 %v294, %v294
    %v301 = vmul.f32 %v296, %v296
    %v302 = vadd.f32 %v298, %v299
    %v303 = vadd.f32 %v302, %v300
    %v304 = vadd.f32 %v303, %v301
    %v305 = vrsqrt.pop %v304
    %v306 = vmul.f32 %v305, %v304
    %v307 = vmul.f32 %v306, %v305
    %v308 = vmul.f32 0.5, %v307
    %v309 = vsub.f32 1.5, %v308
    %v310 = vmul.f32 %v305, %v309
    %v311 = vmul.f32 %v304, %v310
    %vm312 = vcmp.eq.f32.partialorder %v304, inf
    %v313 = vsel %vm312, %v304, %v311
    %vm314 = vcmp.eq.f32.partialorder %v304, 0.0
    %v315 = vand.u32 %v304, 2147483648
    %v316 = vsel %vm314, %v315, %v313
    %v317 = vadd.f32 %v304, 1.0
    %v318 = vrcp.pop %v317
    %v319 = vmul.f32 %v317, %v318
    %v320 = vsub.f32 1.0, %v319
    %v321 = vmul.f32 %v318, %v320
    %v322 = vadd.f32 %v318, %v321
    %vm323 = vweird.f32 %v317
    %vm324 = vweird.f32 %v318
    %vm325 = vmor %vm323, %vm324
    %v326 = vsel %vm325, %v318, %v322
    %v327 = vand.u32 2147483647, %v317
    %vm328 = vcmp.eq.f32.partialorder %v327, 8.507059e+37
    %v329 = vand.u32 %v317, 2147483648
    %v330 = vor.u32 1.1754944e-38, %v329
    %v331 = vsel %vm328, %v330, %v326
    %v332 = vmul.f32 %v316, %v331
    %v333 = vmul.f32 %v289, %v332
    %v334 = vmul.f32 %v291, %v332
    %v335 = vmul.f32 %v294, %v332
    %v336 = vmul.f32 %v296, %v332
    %337 = vst [vmem:[#allocation7] sm:$0xff] %v333
    %338 = vst [vmem:[#allocation7 + $0x8] sm:$0xff] %v334
    %339 = vst [vmem:[#allocation7 + $0x10] sm:$0xff] %v335
    %340 = vst [vmem:[#allocation7 + $0x18] sm:$0xff] %v336
    // Predicated region
    $region22: #{tpu_custom_call.1} parent=1 // pred_check
      _
    $region23: #{tpu_custom_call.1} parent=1 // pred_check_branch
      %342 = sbr.rel (0) target = $region25
    $region24: #{tpu_custom_call.1} parent=1 // pred_region
      %344 = vsyncadd [#allocation4], 0
      %s345 = sshll.u32 [#allocation7], 4
      %s346 = int_to_ptr.vmem [resolvable:$true] %s345
      %s347 = sshll.u32 %s3, 4
      %s348 = int_to_ptr.hbm [resolvable:$true] %s347
      %353 = dma.vmem_to_hbm [thread:$0]  %s346, 512, %s348, [#allocation4], 128, 128, 8
    $region25: #{tpu_custom_call.1} parent=1 // pred_fallthru
      _
    // Predicated region
    $region26: #{tpu_custom_call.1} parent=1 // pred_check
      _
    $region27: #{tpu_custom_call.1} parent=1 // pred_check_branch
      %355 = sbr.rel (0) target = $region29
    $region28: #{tpu_custom_call.1} parent=1 // pred_region
      %357 = dma.done [#allocation4], 512
    $region29: #{tpu_custom_call.1} parent=1 // pred_fallthru
      _
    %358 = vsyncpa [#allocation3], 1
    %359 = vsyncpa [#allocation6], 1
    %360 = vsyncpa [#allocation4], 1

</llo_original>
